<compile_context>
chip_gen: v6e
topology: v6e:2x2x1
jax: 0.10.0
libtpu: 0.0.40
codegen_flags: <defaults>
</compile_context>

<pallas_src>
from functools import partial

import numpy as np
import jax
import jax.numpy as jnp
from jax.experimental import pallas as pl
from jax.experimental.pallas import tpu as pltpu


# ----------------------------------------------------------------------------
# Host-side (numpy) hierarchy helpers — parameter setup only, mirrors the
# PyTorch module's __init__ for margin='depth_dist', with_leaf_targets=True.
# ----------------------------------------------------------------------------
def _edges(parents):
    return list(zip(parents[1:], range(1, len(parents))))


def _depths(parents):
    d = np.zeros(len(parents), dtype=np.int64)
    for i, j in _edges(parents):
        d[j] = d[i] + 1
    return d


def _leaf_subset(parents):
    n = len(parents)
    cnt = np.zeros(n, dtype=np.int64)
    for p in parents[1:]:
        cnt[p] += 1
    return np.flatnonzero(cnt == 0)


def _ancestor_mask(parents, strict=False):
    n = len(parents)
    is_descendant = np.zeros((n, n), dtype=bool)
    if not strict:
        is_descendant[0, 0] = True
    for i, j in _edges(parents):
        assert i < j
        is_descendant[j, :] = is_descendant[i, :]
        if strict:
            is_descendant[j, i] = True
        else:
            is_descendant[j, j] = True
    return is_descendant.T  # is_ancestor[a, d]


def _paths_padded(parents):
    n = len(parents)
    is_ancestor = _ancestor_mask(parents, strict=False)
    paths = [np.flatnonzero(is_ancestor[:, d]) for d in range(n)]
    max_len = max(len(p) for p in paths)
    padded = np.full((n, max_len), -1, dtype=np.int64)
    for d, p in enumerate(paths):
        padded[d, : len(p)] = p
    return padded


def _find_lca(paths, inds_a, inds_b):
    pa = paths[inds_a]
    pb = paths[inds_b]
    num_common = np.count_nonzero((pa == pb) & (pa >= 0) & (pb >= 0), axis=-1)
    return paths[inds_a, num_common - 1]


def build_margin_depth_dist(parents, label_order):
    """margin[l, n] = LCA depth-dist between class l's node and node n."""
    n = len(parents)
    depth = _depths(parents)
    paths = _paths_padded(parents)
    gt = np.asarray(label_order)[:, None]
    pr = np.arange(n)[None, :]
    lca = _find_lca(paths, gt, pr)
    dist = (depth[pr] - depth[lca]) + (depth[gt] - depth[lca])
    return dist.astype(np.float32)


# ----------------------------------------------------------------------------
# Pallas kernel: fused margin loss (online logsumexp / running max over nodes).
# ----------------------------------------------------------------------------
def _margin_loss_kernel(scores_ref, margin_ref, node_ref, loss_ref,
                        m_ref, l_ref, s_ref, *,
                        tau, tile_n, n_total, hardness, needs_col_mask):
    j = pl.program_id(1)

    @pl.when(j == 0)
    def _():
        m_ref[...] = jnp.full_like(m_ref, -jnp.inf)
        s_ref[...] = jnp.zeros_like(s_ref)
        if hardness == "soft":
            l_ref[...] = jnp.zeros_like(l_ref)

    scores = scores_ref[...].astype(jnp.float32)           # (tile_b, tile_n)
    z = scores + tau * margin_ref[...].astype(jnp.float32)

    # Global column index of every lane in this node tile.
    col = j * tile_n + jax.lax.broadcasted_iota(jnp.int32, z.shape, 1)
    if needs_col_mask:
        # Partial boundary node tile: OOB lanes hold garbage -> never win the
        # max, exp underflows to 0.
        z = jnp.where(col < n_total, z, -1e30)

    # Running max (both modes); online logsumexp (soft only, EUP work skipped
    # entirely in hard mode).
    m_prev = m_ref[...]
    m_new = jnp.maximum(m_prev, jnp.max(z, axis=-1, keepdims=True))
    m_ref[...] = m_new
    if hardness == "soft":
        alpha = jnp.exp(m_prev - m_new)
        p = jnp.exp(z - m_new)
        l_ref[...] = alpha * l_ref[...] + jnp.sum(p, axis=-1, keepdims=True)

    # label_score gather fused in-kernel: masked sum against the column iota.
    hit = col == node_ref[...]                              # (tile_b, tile_n)
    s_ref[...] += jnp.sum(jnp.where(hit, scores, 0.0), axis=-1, keepdims=True)

    @pl.when(j == pl.num_programs(1) - 1)
    def _():
        if hardness == "soft":
            lse = m_ref[...] + jnp.log(l_ref[...])
            loss_ref[...] = (lse - s_ref[...]).astype(loss_ref.dtype)
        else:  # hard: relu(max_n(scores + tau*margin) - label_score)
            loss_ref[...] = jnp.maximum(m_ref[...] - s_ref[...], 0.0).astype(loss_ref.dtype)


def _choose_tile(dim, tile, align):
    """Full-dim block when it fits, otherwise an `align`-aligned tile."""
    if dim <= tile:
        return dim
    return max(align, (tile // align) * align)


def margin_loss_forward(scores, labels, label_order, margin, *,
                        tau=1.0, hardness="soft", tile_b=256, tile_n=1024):
    """Pallas equivalent of MarginLoss.forward(scores, labels) -> scalar mean loss."""
    assert hardness in ("soft", "hard")
    B, N = scores.shape

    # Cheap data-dependent setup kept in the JAX wrapper (argmax + row gather).
    labels_idx = jnp.argmax(labels, axis=1).astype(jnp.int32)                 # [B]
    label_node = jnp.asarray(label_order, jnp.int32)[labels_idx][:, None]     # [B, 1]
    label_margin = jnp.asarray(margin)[labels_idx]                            # [B, N]
    # TODO(synk): move the margin row gather in-kernel (scalar prefetch +
    # in-VMEM row gather) if the gathered-margin [B, N] HBM read ever dominates
    # (pays off when num_classes << batch tile).

    tile_b = _choose_tile(B, tile_b, 8)       # sublane-aligned or full dim
    tile_n = _choose_tile(N, tile_n, 128)     # lane-aligned or full dim
    grid = (pl.cdiv(B, tile_b), pl.cdiv(N, tile_n))

    kernel = partial(_margin_loss_kernel,
                     tau=float(tau), tile_n=tile_n, n_total=N,
                     hardness=hardness, needs_col_mask=(N % tile_n) != 0)

    loss_rows = pl.pallas_call(
        kernel,
        out_shape=jax.ShapeDtypeStruct((B, 1), jnp.float32),
        grid_spec=pltpu.PrefetchScalarGridSpec(
            num_scalar_prefetch=0,
            grid=grid,
            in_specs=[
                pl.BlockSpec((tile_b, tile_n), lambda i, j: (i, j)),   # scores
                pl.BlockSpec((tile_b, tile_n), lambda i, j: (i, j)),   # gathered margin
                pl.BlockSpec((tile_b, 1), lambda i, j: (i, 0)),        # label node ids
            ],
            out_specs=pl.BlockSpec((tile_b, 1), lambda i, j: (i, 0)),
            scratch_shapes=[pltpu.VMEM((tile_b, 1), jnp.float32)] * 3,
        ),
        compiler_params=pltpu.CompilerParams(
            dimension_semantics=("parallel", "arbitrary"),
        ),
    )(scores, label_margin, label_node)

    return jnp.mean(loss_rows)


# ----------------------------------------------------------------------------
# Pure-JAX reference (mirrors the torch forward) for verification.
# ----------------------------------------------------------------------------
def margin_loss_ref(scores, labels, label_order, margin, tau, hardness):
    labels_idx = jnp.argmax(labels, axis=1)
    label_node = jnp.asarray(label_order)[labels_idx]
    label_score = jnp.take_along_axis(scores, label_node[:, None], axis=-1)[:, 0]
    label_margin = jnp.asarray(margin)[labels_idx]
    x = scores + tau * label_margin
    if hardness == "soft":
        m = jnp.max(x, axis=-1, keepdims=True)
        lse = m[:, 0] + jnp.log(jnp.sum(jnp.exp(x - m), axis=-1))
        loss = -label_score + lse
    else:
        loss = jnp.maximum(jnp.max(x - label_score[:, None], axis=-1), 0.0)
    return jnp.mean(loss)


if __name__ == "__main__":
    # Deterministic binary tree with 64 nodes: parents[i] = (i-1)//2 (topological).
    n_nodes = 64
    parents = np.concatenate([[-1], (np.arange(1, n_nodes) - 1) // 2]).astype(np.int64)

    label_order_np = _leaf_subset(parents)                        # 32 leaf classes
    margin_np = build_margin_depth_dist(parents, label_order_np)  # [32, 64]

    B = 16
    key = jax.random.PRNGKey(0)
    k1, k2 = jax.random.split(key)
    scores = jax.random.normal(k1, (B, n_nodes), dtype=jnp.float32)
    labels = jax.random.normal(k2, (B, len(label_order_np)), dtype=jnp.float32)  # argmax'd like torch

    label_order_j = jnp.asarray(label_order_np, jnp.int32)
    margin_j = jnp.asarray(margin_np, jnp.float32)

    for hardness in ("soft", "hard"):
        out = margin_loss_forward(scores, labels, label_order_j, margin_j,
                                  tau=1.0, hardness=hardness)
        out = jax.block_until_ready(out)
        ref = margin_loss_ref(scores, labels, label_order_j, margin_j, 1.0, hardness)
        np.testing.assert_allclose(np.asarray(out), np.asarray(ref), rtol=1e-5, atol=1e-5)

    print("KERNEL_OK")
</pallas_src>

<mosaic_0001>
module attributes {stable_mosaic.version = 11 : i64} {
  func.func @_margin_loss_kernel(%arg0: i32, %arg1: i32, %arg2: memref<16x64xf32, #tpu.memory_space<vmem>>, %arg3: memref<16x64xf32, #tpu.memory_space<vmem>>, %arg4: memref<16x1xi32, #tpu.memory_space<vmem>>, %arg5: memref<16x1xf32, #tpu.memory_space<vmem>>, %arg6: memref<16x1xf32, #tpu.memory_space<vmem>>, %arg7: memref<16x1xf32, #tpu.memory_space<vmem>>, %arg8: memref<16x1xf32, #tpu.memory_space<vmem>>) attributes {dimension_semantics = [#tpu.dimension_semantics<parallel>, #tpu.dimension_semantics<arbitrary>], iteration_bounds = array<i64: 1, 1>, scalar_prefetch = 0 : i64, scratch_operands = 3 : i64, tpu.core_type = #tpu.core_type<tc>, window_params = [{transform_indices = @transform_0, window_bounds = array<i64: 16, 64>}, {transform_indices = @transform_1, window_bounds = array<i64: 16, 64>}, {transform_indices = @transform_2, window_bounds = array<i64: 16, 1>}, {transform_indices = @transform_3, window_bounds = array<i64: 16, 1>}]} {
    %c0_i32 = arith.constant 0 : i32
    %0 = arith.cmpi eq, %arg1, %c0_i32 : i32
    %1 = arith.extui %0 : i1 to i32
    %c0_i32_0 = arith.constant 0 : i32
    %2 = arith.cmpi ne, %1, %c0_i32_0 : i32
    scf.if %2 {
      %cst_24 = arith.constant 0xFF800000 : f32
      %41 = vector.broadcast %cst_24 : f32 to vector<16x1xf32>
      %c0_25 = arith.constant 0 : index
      %c0_26 = arith.constant 0 : index
      %42 = vector.load %arg6[%c0_25, %c0_26] : memref<16x1xf32, #tpu.memory_space<vmem>>, vector<16x1xf32>
      tpu.vector_store %arg6[%c0_25, %c0_26], %41 {strides = array<i32>} : memref<16x1xf32, #tpu.memory_space<vmem>>, vector<16x1xf32>,
      %cst_27 = arith.constant 0.000000e+00 : f32
      %43 = vector.broadcast %cst_27 : f32 to vector<16x1xf32>
      %c0_28 = arith.constant 0 : index
      %c0_29 = arith.constant 0 : index
      %44 = vector.load %arg8[%c0_28, %c0_29] : memref<16x1xf32, #tpu.memory_space<vmem>>, vector<16x1xf32>
      tpu.vector_store %arg8[%c0_28, %c0_29], %43 {strides = array<i32>} : memref<16x1xf32, #tpu.memory_space<vmem>>, vector<16x1xf32>,
      %cst_30 = arith.constant 0.000000e+00 : f32
      %45 = vector.broadcast %cst_30 : f32 to vector<16x1xf32>
      %c0_31 = arith.constant 0 : index
      %c0_32 = arith.constant 0 : index
      %46 = vector.load %arg7[%c0_31, %c0_32] : memref<16x1xf32, #tpu.memory_space<vmem>>, vector<16x1xf32>
      tpu.vector_store %arg7[%c0_31, %c0_32], %45 {strides = array<i32>} : memref<16x1xf32, #tpu.memory_space<vmem>>, vector<16x1xf32>,
    } else {
    }
    %c0 = arith.constant 0 : index
    %c0_1 = arith.constant 0 : index
    %3 = vector.load %arg2[%c0, %c0_1] : memref<16x64xf32, #tpu.memory_space<vmem>>, vector<16x64xf32>
    %c0_2 = arith.constant 0 : index
    %c0_3 = arith.constant 0 : index
    %4 = vector.load %arg3[%c0_2, %c0_3] : memref<16x64xf32, #tpu.memory_space<vmem>>, vector<16x64xf32>
    %cst = arith.constant 1.000000e+00 : f32
    %5 = vector.broadcast %cst : f32 to vector<16x64xf32>
    %6 = arith.mulf %5, %4 : vector<16x64xf32>
    %7 = arith.addf %3, %6 : vector<16x64xf32>
    %c64_i32 = arith.constant 64 : i32
    %8 = arith.muli %arg1, %c64_i32 : i32
    %9 = tpu.iota {dimensions = array<i32: 1>} : vector<16x64xi32>
    %10 = vector.broadcast %8 : i32 to vector<16x64xi32>
    %11 = arith.addi %10, %9 : vector<16x64xi32>
    %c0_4 = arith.constant 0 : index
    %c0_5 = arith.constant 0 : index
    %12 = vector.load %arg6[%c0_4, %c0_5] : memref<16x1xf32, #tpu.memory_space<vmem>>, vector<16x1xf32>
    %cst_6 = arith.constant dense<0xFF800000> : vector<16xf32>
    %13 = vector.multi_reduction <maximumf>, %7, %cst_6 [1] : vector<16x64xf32> to vector<16xf32>
    %14 = vector.shape_cast %13 : vector<16xf32> to vector<16x1xf32>
    %15 = arith.maximumf %12, %14 : vector<16x1xf32>
    %c0_7 = arith.constant 0 : index
    %c0_8 = arith.constant 0 : index
    %16 = vector.load %arg6[%c0_7, %c0_8] : memref<16x1xf32, #tpu.memory_space<vmem>>, vector<16x1xf32>
    tpu.vector_store %arg6[%c0_7, %c0_8], %15 {strides = array<i32>} : memref<16x1xf32, #tpu.memory_space<vmem>>, vector<16x1xf32>,
    %17 = arith.subf %12, %15 : vector<16x1xf32>
    %18 = math.exp %17 : vector<16x1xf32>
    %19 = vector.broadcast %15 : vector<16x1xf32> to vector<16x64xf32>
    %20 = arith.subf %7, %19 : vector<16x64xf32>
    %21 = math.exp %20 : vector<16x64xf32>
    %c0_9 = arith.constant 0 : index
    %c0_10 = arith.constant 0 : index
    %22 = vector.load %arg7[%c0_9, %c0_10] : memref<16x1xf32, #tpu.memory_space<vmem>>, vector<16x1xf32>
    %23 = arith.mulf %18, %22 : vector<16x1xf32>
    %cst_11 = arith.constant dense<0.000000e+00> : vector<16xf32>
    %24 = vector.multi_reduction <add>, %21, %cst_11 [1] : vector<16x64xf32> to vector<16xf32>
    %25 = vector.shape_cast %24 : vector<16xf32> to vector<16x1xf32>
    %26 = arith.addf %23, %25 : vector<16x1xf32>
    %c0_12 = arith.constant 0 : index
    %c0_13 = arith.constant 0 : index
    %27 = vector.load %arg7[%c0_12, %c0_13] : memref<16x1xf32, #tpu.memory_space<vmem>>, vector<16x1xf32>
    tpu.vector_store %arg7[%c0_12, %c0_13], %26 {strides = array<i32>} : memref<16x1xf32, #tpu.memory_space<vmem>>, vector<16x1xf32>,
    %c0_14 = arith.constant 0 : index
    %c0_15 = arith.constant 0 : index
    %28 = vector.load %arg4[%c0_14, %c0_15] : memref<16x1xi32, #tpu.memory_space<vmem>>, vector<16x1xi32>
    %29 = vector.broadcast %28 : vector<16x1xi32> to vector<16x64xi32>
    %30 = arith.cmpi eq, %11, %29 : vector<16x64xi32>
    %c0_16 = arith.constant 0 : index
    %c0_17 = arith.constant 0 : index
    %31 = vector.load %arg8[%c0_16, %c0_17] : memref<16x1xf32, #tpu.memory_space<vmem>>, vector<16x1xf32>
    %cst_18 = arith.constant 0.000000e+00 : f32
    %32 = vector.broadcast %cst_18 : f32 to vector<16x64xf32>
    %33 = arith.select %30, %3, %32 : vector<16x64xi1>, vector<16x64xf32>
    %cst_19 = arith.constant dense<0.000000e+00> : vector<16xf32>
    %34 = vector.multi_reduction <add>, %33, %cst_19 [1] : vector<16x64xf32> to vector<16xf32>
    %35 = vector.shape_cast %34 : vector<16xf32> to vector<16x1xf32>
    %36 = arith.addf %31, %35 : vector<16x1xf32>
    %c0_20 = arith.constant 0 : index
    %c0_21 = arith.constant 0 : index
    %37 = vector.load %arg8[%c0_20, %c0_21] : memref<16x1xf32, #tpu.memory_space<vmem>>, vector<16x1xf32>
    tpu.vector_store %arg8[%c0_20, %c0_21], %36 {strides = array<i32>} : memref<16x1xf32, #tpu.memory_space<vmem>>, vector<16x1xf32>,
    %c0_i32_22 = arith.constant 0 : i32
    %38 = arith.cmpi eq, %arg1, %c0_i32_22 : i32
    %39 = arith.extui %38 : i1 to i32
    %c0_i32_23 = arith.constant 0 : i32
    %40 = arith.cmpi ne, %39, %c0_i32_23 : i32
    scf.if %40 {
      %c0_24 = arith.constant 0 : index
      %c0_25 = arith.constant 0 : index
      %41 = vector.load %arg6[%c0_24, %c0_25] : memref<16x1xf32, #tpu.memory_space<vmem>>, vector<16x1xf32>
      %c0_26 = arith.constant 0 : index
      %c0_27 = arith.constant 0 : index
      %42 = vector.load %arg7[%c0_26, %c0_27] : memref<16x1xf32, #tpu.memory_space<vmem>>, vector<16x1xf32>
      %43 = math.log %42 : vector<16x1xf32>
      %44 = arith.addf %41, %43 : vector<16x1xf32>
      %c0_28 = arith.constant 0 : index
      %c0_29 = arith.constant 0 : index
      %45 = vector.load %arg8[%c0_28, %c0_29] : memref<16x1xf32, #tpu.memory_space<vmem>>, vector<16x1xf32>
      %46 = arith.subf %44, %45 : vector<16x1xf32>
      %c0_30 = arith.constant 0 : index
      %c0_31 = arith.constant 0 : index
      %47 = vector.load %arg5[%c0_30, %c0_31] : memref<16x1xf32, #tpu.memory_space<vmem>>, vector<16x1xf32>
      tpu.vector_store %arg5[%c0_30, %c0_31], %46 {strides = array<i32>} : memref<16x1xf32, #tpu.memory_space<vmem>>, vector<16x1xf32>,
    } else {
    }
    return
  }
  func.func @transform_0(%arg0: i32, %arg1: i32) -> (i32, i32) {
    %c0_i32 = arith.constant 0 : i32
    return %arg0, %arg1 : i32, i32
  }
  func.func @transform_1(%arg0: i32, %arg1: i32) -> (i32, i32) {
    %c0_i32 = arith.constant 0 : i32
    return %arg0, %arg1 : i32, i32
  }
  func.func @transform_2(%arg0: i32, %arg1: i32) -> (i32, i32) {
    %c0_i32 = arith.constant 0 : i32
    %c0_i32_0 = arith.constant 0 : i32
    return %arg0, %c0_i32 : i32, i32
  }
  func.func @transform_3(%arg0: i32, %arg1: i32) -> (i32, i32) {
    %c0_i32 = arith.constant 0 : i32
    %c0_i32_0 = arith.constant 0 : i32
    return %arg0, %c0_i32 : i32, i32
  }
}

</mosaic_0001>

<llo_original>
// kernel: tpu_custom_call.1
$region0: #{tpu_custom_call.1}
  #allocation0 [shape = 'u32[]', space=smem, size = 0x4, offset = 0x4, fixed_abs, tag = 'smem constant byte address 0x4 - core index']
  #allocation1 [shape = 'u32[144,128]{1,0:T(1,128)}', space=vmem, size = 0x12000, scoped, tag = 'internal scratch']
  #allocation2 [shape = 'f32[16,1]{1,0:T(8,128)}', space=vmem, size = 0x2000, scoped, tag = 'scratch operand']
  #allocation3 [shape = 'f32[16,1]{1,0:T(8,128)}', space=vmem, size = 0x2000, scoped, tag = 'scratch operand']
  #allocation4 [shape = 'f32[16,1]{1,0:T(8,128)}', space=vmem, size = 0x2000, scoped, tag = 'scratch operand']
  %s0 = inlined_call_operand.vmem [shape: f32[16,64], index: 0, kind: input, shape index: {}]
  %s1 = inlined_call_operand.hbm [shape: f32[16,64], index: 1, kind: input, shape index: {}]
  %s2 = inlined_call_operand.vmem [shape: s32[16,1], index: 2, kind: input, shape index: {}]
  %s3 = inlined_call_operand.vmem [shape: f32[16,1], index: 3, kind: output, shape index: {}]
  %s4 = sld [smem:[#allocation0]]
  $region34: #{tpu_custom_call.1} parent=0
    _
  %s6 = ssub.s32 1, %s4
  %s7 = scalar_select 0, %s6, %s4
  $region1: #{tpu_custom_call.1} parent=0
    #allocation5 [shape = 'u8[8192]{0}', space=vmem, size = 0x2000, scoped, tag = 'input window, operand 1, single buffered']
    #allocation6 [shape = 's32[1]{0}', space=sflag, size = 0x4, scoped, tag = 'scoped memory for tpu_custom_call.1']
    %8 = vsyncpa [#allocation6], 0
    // Predicated region
    $region2: #{tpu_custom_call.1} parent=1 // pred_check
      _
    $region3: #{tpu_custom_call.1} parent=1 // pred_check_branch
      %10 = sbr.rel (0) target = $region5
    $region4: #{tpu_custom_call.1} parent=1 // pred_region
      _
    $region5: #{tpu_custom_call.1} parent=1 // pred_fallthru
      _
    // Predicated region
    $region6: #{tpu_custom_call.1} parent=1 // pred_check
      _
    $region7: #{tpu_custom_call.1} parent=1 // pred_check_branch
      %12 = sbr.rel (0) target = $region9
    $region8: #{tpu_custom_call.1} parent=1 // pred_region
      %s14 = ssub.s32 256, 256
      %15 = vsyncadd [#allocation6], %s14
      %s16 = sshll.u32 [#allocation5], 4
      %s17 = int_to_ptr.vmem [resolvable:$true] %s16
      %22 = dma.hbm_to_vmem [thread:$0]  %s1, 256, %s17, [#allocation6], 128, 128, 8
    $region9: #{tpu_custom_call.1} parent=1 // pred_fallthru
      _
    // Predicated region
    $region10: #{tpu_custom_call.1} parent=1 // pred_check
      _
    $region11: #{tpu_custom_call.1} parent=1 // pred_check_branch
      %24 = sbr.rel (0) target = $region13
    $region12: #{tpu_custom_call.1} parent=1 // pred_region
      _
    $region13: #{tpu_custom_call.1} parent=1 // pred_fallthru
      _
    // Predicated region
    $region14: #{tpu_custom_call.1} parent=1 // pred_check
      _
    $region15: #{tpu_custom_call.1} parent=1 // pred_check_branch
      %26 = sbr.rel (0) target = $region17
    $region16: #{tpu_custom_call.1} parent=1 // pred_region
      %27 = dma.done [#allocation6], 256
    $region17: #{tpu_custom_call.1} parent=1 // pred_fallthru
      _
    %p28 = scmp.eq.s32.totalorder 0, 0
    // Predicated region
    $region18: #{tpu_custom_call.1} parent=1 // pred_check
      %p29 = pneg %p28
    $region19: #{tpu_custom_call.1} parent=1 // pred_check_branch
      %31 = sbr.rel (%p29) target = $region21
    $region20: #{tpu_custom_call.1} parent=1 // pred_region
      %vm32 = vcmask 7168
      %33 = vst.msk [vmem:[#allocation2] sm:$0xff] %vm32, -inf
      %34 = vst.msk [vmem:[#allocation2 + $0x8] sm:$0xff] %vm32, -inf
      %35 = vst.msk [vmem:[#allocation4] sm:$0xff] %vm32, 0.0
      %36 = vst.msk [vmem:[#allocation4 + $0x8] sm:$0xff] %vm32, 0.0
      %37 = vst.msk [vmem:[#allocation3] sm:$0xff] %vm32, 0.0
      %38 = vst.msk [vmem:[#allocation3 + $0x8] sm:$0xff] %vm32, 0.0
    $region21: #{tpu_custom_call.1} parent=1 // pred_fallthru
      _
    %v39 = vld [vmem:[%s0] sm:$0xff]
    %v40 = vld [vmem:[%s0 + $0x8] sm:$0xff]
    %v41 = vld [vmem:[#allocation5] sm:$0xff]
    %v42 = vld [vmem:[#allocation5 + $0x8] sm:$0xff]
    %v43 = vadd.f32 %v39, %v41
    %v44 = vadd.f32 %v40, %v42
    %s45 = smul.u32 0, 64
    %v46 = vlaneseq
    %v47 = vand.u32 %v46, 127
    %v48 = vstv %s45
    %v49 = vadd.s32 %v48, %v47
    %v50 = vld [vmem:[#allocation2] sm:$0xff]
    %v51 = vld [vmem:[#allocation2 + $0x8] sm:$0xff]
    %vm52 = vcmask 523264
    %v53 = vsel %vm52, %v43, -inf
    %54 = vmax.xlane.f32.xlu0 %v53
    %v55 = vpop.xlane.xlu0 %54
    %v56 = vsel %vm52, %v44, -inf
    %57 = vmax.xlane.f32.xlu0 %v56
    %v58 = vpop.xlane.xlu0 %57
    %v59 = vmax.f32 %v50, %v55
    %v60 = vmax.f32 %v51, %v58
    %vm61 = vcmask 7168
    %62 = vst.msk [vmem:[#allocation2] sm:$0xff] %vm61, %v59
    %63 = vst.msk [vmem:[#allocation2 + $0x8] sm:$0xff] %vm61, %v60
    %v64 = vsub.f32 %v50, %v59
    %v65 = vsub.f32 %v51, %v60
    %v66 = vmul.f32 %v64, 1.442695
    %v67 = vpow.pop %v66
    %v68 = vmul.f32 %v65, 1.442695
    %v69 = vpow.pop %v68
    %71 = vset.pattern.permute.xlu0 0
    %72 = vperm.xlu0 %71, %v59
    %v73 = vpop.permute.xlu0 %72
    %76 = vset.pattern.permute.xlu0 0
    %77 = vperm.xlu0 %76, %v60
    %v78 = vpop.permute.xlu0 %77
    %v80 = vsub.f32 %v43, %v73
    %v81 = vsub.f32 %v44, %v78
    %v82 = vmul.f32 %v80, 1.442695
    %v83 = vpow.pop %v82
    %v84 = vmul.f32 %v81, 1.442695
    %v85 = vpow.pop %v84
    %v86 = vld [vmem:[#allocation3] sm:$0xff]
    %v87 = vld [vmem:[#allocation3 + $0x8] sm:$0xff]
    %v88 = vmul.f32 %v67, %v86
    %v89 = vmul.f32 %v69, %v87
    %v90 = vsel %vm52, %v83, 0.0
    %91 = vadd.xlane.f32.xlu0 %v90
    %v92 = vpop.xlane.xlu0 %91
    %v93 = vsel %vm52, %v85, 0.0
    %94 = vadd.xlane.f32.xlu0 %v93
    %v95 = vpop.xlane.xlu0 %94
    %v96 = vadd.f32 %v88, %v92
    %v97 = vadd.f32 %v89, %v95
    %98 = vst.msk [vmem:[#allocation3] sm:$0xff] %vm61, %v96
    %99 = vst.msk [vmem:[#allocation3 + $0x8] sm:$0xff] %vm61, %v97
    %v100 = vld [vmem:[%s2] sm:$0xff]
    %v101 = vld [vmem:[%s2 + $0x8] sm:$0xff]
    %102 = vset.pattern.permute.xlu0 0
    %103 = vperm.xlu0 %102, %v100
    %v104 = vpop.permute.xlu0 %103
    %105 = vset.pattern.permute.xlu0 0
    %106 = vperm.xlu0 %105, %v101
    %v107 = vpop.permute.xlu0 %106
    %vm108 = vcmp.eq.s32.totalorder %v49, %v104
    %vm109 = vcmp.eq.s32.totalorder %v49, %v107
    %v110 = vld [vmem:[#allocation4] sm:$0xff]
    %v111 = vld [vmem:[#allocation4 + $0x8] sm:$0xff]
    %v112 = vsel %vm108, %v39, 0.0
    %v113 = vsel %vm109, %v40, 0.0
    %v114 = vsel %vm52, %v112, 0.0
    %115 = vadd.xlane.f32.xlu0 %v114
    %v116 = vpop.xlane.xlu0 %115
    %v117 = vsel %vm52, %v113, 0.0
    %118 = vadd.xlane.f32.xlu0 %v117
    %v119 = vpop.xlane.xlu0 %118
    %v120 = vadd.f32 %v110, %v116
    %v121 = vadd.f32 %v111, %v119
    %122 = vst.msk [vmem:[#allocation4] sm:$0xff] %vm61, %v120
    %123 = vst.msk [vmem:[#allocation4 + $0x8] sm:$0xff] %vm61, %v121
    // Predicated region
    $region22: #{tpu_custom_call.1} parent=1 // pred_check
      %p124 = pneg %p28
    $region23: #{tpu_custom_call.1} parent=1 // pred_check_branch
      %126 = sbr.rel (%p124) target = $region25
    $region24: #{tpu_custom_call.1} parent=1 // pred_region
      %v127 = vld [vmem:[#allocation2] sm:$0xff]
      %v128 = vld [vmem:[#allocation2 + $0x8] sm:$0xff]
      %v129 = vld [vmem:[#allocation3] sm:$0xff]
      %v130 = vld [vmem:[#allocation3 + $0x8] sm:$0xff]
      %v131 = vlog2.pop %v129
      %v132 = vmul.f32 %v131, 0.6931472
      %v133 = vlog2.pop %v130
      %v134 = vmul.f32 %v133, 0.6931472
      %v135 = vadd.f32 %v127, %v132
      %v136 = vadd.f32 %v128, %v134
      %v137 = vld [vmem:[#allocation4] sm:$0xff]
      %v138 = vld [vmem:[#allocation4 + $0x8] sm:$0xff]
      %v139 = vsub.f32 %v135, %v137
      %v140 = vsub.f32 %v136, %v138
      %141 = vst.msk [vmem:[%s3] sm:$0xff] %vm61, %v139
      %142 = vst.msk [vmem:[%s3 + $0x8] sm:$0xff] %vm61, %v140
    $region25: #{tpu_custom_call.1} parent=1 // pred_fallthru
      _
    // Predicated region
    $region26: #{tpu_custom_call.1} parent=1 // pred_check
      _
    $region27: #{tpu_custom_call.1} parent=1 // pred_check_branch
      %144 = sbr.rel (0) target = $region29
    $region28: #{tpu_custom_call.1} parent=1 // pred_region
      _
    $region29: #{tpu_custom_call.1} parent=1 // pred_fallthru
      _
    // Predicated region
    $region30: #{tpu_custom_call.1} parent=1 // pred_check
      _
    $region31: #{tpu_custom_call.1} parent=1 // pred_check_branch
      %146 = sbr.rel (0) target = $region33
    $region32: #{tpu_custom_call.1} parent=1 // pred_region
      _
    $region33: #{tpu_custom_call.1} parent=1 // pred_fallthru
      _
    %147 = vsyncpa [#allocation6], 1

</llo_original>
